<compile_context>
chip_gen: v7x
topology: tpu7x:2x2x1
jax: 0.10.0
libtpu: 0.0.40
codegen_flags: <defaults>
</compile_context>

<pallas_src>
import functools
import math

import jax
import jax.numpy as jnp
from jax.experimental import pallas as pl
from jax.experimental.pallas import tpu as pltpu

_LANE = 128
_SUBLANE = 8


def _classify_kernel(x_ref, w_ref, o_ref, acc_ref, *, spatial, chunk, mask_last):
    # x_ref: (TB, C1e, THW)   w_ref: (C1e, C2p)   o_ref: (TB, C2p)   acc_ref: (TB, C1e) f32
    k = pl.program_id(1)                 # spatial-reduction step (innermost, "arbitrary")
    nk = pl.num_programs(1)

    @pl.when(k == 0)
    def _init():
        acc_ref[...] = jnp.zeros_like(acc_ref)

    if mask_last:
        # Unmasked accumulate for all but the boundary block; the iota/compare/
        # select only runs on the final reduction step.
        @pl.when(k != nk - 1)
        def _acc_plain():
            acc_ref[...] += jnp.sum(x_ref[...].astype(jnp.float32), axis=-1)

        @pl.when(k == nk - 1)
        def _acc_masked():
            x = x_ref[...].astype(jnp.float32)
            col = jax.lax.broadcasted_iota(jnp.int32, x.shape, 2) + k * chunk
            x = jnp.where(col < spatial, x, 0.0)
            acc_ref[...] += jnp.sum(x, axis=-1)
    else:
        acc_ref[...] += jnp.sum(x_ref[...].astype(jnp.float32), axis=-1)

    @pl.when(k == nk - 1)
    def _finalize():
        # Weight already transposed to (C1e, C2p) and pre-scaled by 1/(H*W), so
        # this is mean-pool + 1x1 conv in one lane-dense MXU matmul.
        out = jnp.dot(acc_ref[...], w_ref[...], preferred_element_type=jnp.float32)
        o_ref[...] = out.astype(o_ref.dtype)


def classify_forward(x, weight, *, hw_chunk=None, block_budget_bytes=24 * 1024 * 1024):
    """x: (B, C1, H, W) NCHW; weight: (C2, C1) (squeezed 1x1 conv kernel, no bias).

    hw_chunk (optional): override for the spatial chunk on the (possibly
    channel-folded) spatial axis; must be a multiple of 128 if it tiles.
    """
    B, C1, H, W = x.shape
    C2 = weight.shape[0]
    HW = H * W
    itemsize = jnp.dtype(x.dtype).itemsize

    # ---- sublane fold: make the channel axis a multiple of the sublane pack.
    # x.reshape(B, C1*s, HW//s) is a free (contiguous) reshape; the weight rows
    # are repeated s times so the MXU contraction absorbs the extra partial sums.
    s = 1
    if C1 % _SUBLANE != 0:
        need = _SUBLANE // math.gcd(C1, _SUBLANE)
        if need > 1 and HW % need == 0:
            s = need
    C1e, HW2 = C1 * s, HW // s
    x_flat = x.reshape(B, C1e, HW2)

    # ---- weight prep (one-time parameter setup): transpose to (C1, C2), fold
    # the 1/(H*W) mean scale in, repeat rows for the fold, pad C2 to a lane
    # multiple for an unmasked MXU tile / lane-dense store.
    w = weight.astype(jnp.float32).T * (1.0 / HW)        # (C1, C2)
    if s > 1:
        w = jnp.repeat(w, s, axis=0)                     # (C1e, C2)
    C2p = ((C2 + _LANE - 1) // _LANE) * _LANE
    if C2p != C2:
        w = jnp.pad(w, ((0, 0), (0, C2p - C2)))

    # ---- block sizing. Budget covers the double-buffered x block plus the
    # in-kernel f32 temp (astype), so raising the block size never blows VMEM
    # (24 MiB budget keeps the whole call well inside v7x's 64 MiB).
    max_block_elems = max(block_budget_bytes // (2 * itemsize + 4), _LANE)
    row_elems = C1e * HW2

    # Batch tile: largest divisor of B that is <= min(8, B//2) and fits the
    # budget, so there are always >= 2 "parallel" row blocks when B >= 2
    # (lets megacore shard the mem-bound pooling; harmless on single-TC chips).
    TB = 1
    if B > 1 and row_elems <= max_block_elems:
        upper = max(1, min(_SUBLANE, B // 2))
        for t in range(1, upper + 1):
            if B % t == 0 and t * row_elems <= max_block_elems:
                TB = t
    n_rows = B // TB

    # Spatial chunk: prefer the full spatial extent (one contiguous DMA per
    # batch row); otherwise the largest multiple of 128 that fits the budget.
    if hw_chunk is not None:
        THW = min(int(hw_chunk), HW2)
    elif TB * row_elems <= max_block_elems:
        THW = HW2
    else:
        max_cols = max(_LANE, max_block_elems // (TB * C1e))
        THW = min(HW2, (max_cols // _LANE) * _LANE)
    if THW < HW2:
        assert THW % _LANE == 0, "spatial chunk must be a multiple of 128 lanes"
    n_hw = pl.cdiv(HW2, THW)
    mask_last = (HW2 % THW) != 0

    kernel = functools.partial(_classify_kernel, spatial=HW2, chunk=THW,
                               mask_last=mask_last)

    cost = pl.CostEstimate(
        flops=int(B * C1e * HW2 + 2 * B * C1e * C2p),
        transcendentals=0,
        bytes_accessed=int(x_flat.size * itemsize + w.size * 4 + B * C2p * itemsize),
    )

    out = pl.pallas_call(
        kernel,
        # 3-D output (n_rows, TB, C2p): the leading dim is squeezed in the
        # BlockSpec, so the last two block dims (TB, C2p) always equal the full
        # array dims -> (8,128) rule satisfied even for TB < 8.
        out_shape=jax.ShapeDtypeStruct((n_rows, TB, C2p), x.dtype),
        grid_spec=pltpu.PrefetchScalarGridSpec(
            num_scalar_prefetch=0,
            grid=(n_rows, n_hw),
            in_specs=[
                pl.BlockSpec((TB, C1e, THW), lambda i, k: (i, 0, k)),
                pl.BlockSpec((C1e, C2p), lambda i, k: (0, 0)),
            ],
            # Constant index across k -> output block stays resident in VMEM
            # for the whole reduction (no per-step HBM writeback).
            out_specs=pl.BlockSpec((None, TB, C2p), lambda i, k: (i, 0, 0)),
            scratch_shapes=[pltpu.VMEM((TB, C1e), jnp.float32)],
        ),
        compiler_params=pltpu.CompilerParams(
            dimension_semantics=("parallel", "arbitrary"),
            vmem_limit_bytes=48 * 1024 * 1024,
        ),
        cost_estimate=cost,
    )(x_flat, w)

    out = out.reshape(B, C2p)
    return out[:, :C2] if C2p != C2 else out


# TODO(synk): list-input variant of Classify (torch.cat of per-tensor pools
# along channel) is not wired up; single-tensor input (the common case) only.


if __name__ == "__main__":
    # Module config: Classify(c1=4, c2=8, k=1, s=1, p=None, g=1)
    B, C1, H, W = 2, 4, 16, 16
    C2 = 8

    key = jax.random.PRNGKey(0)
    kx, kw = jax.random.split(key)
    x = jax.random.normal(kx, (B, C1, H, W), dtype=jnp.float32)
    # Conv2d(c1, c2, 1, bias=False) weight -> (C2, C1, 1, 1), squeezed to (C2, C1).
    bound = 1.0 / (C1 ** 0.5)
    weight = jax.random.uniform(kw, (C2, C1), dtype=jnp.float32,
                                minval=-bound, maxval=bound)

    # 1) Default path: channel fold (C1=4 -> 8), full-spatial contiguous block,
    #    two parallel batch blocks (TB=1, n_rows=2).
    out = jax.block_until_ready(classify_forward(x, weight))
    ref = jnp.mean(x, axis=(2, 3)) @ weight.T            # (B, C2)
    assert out.shape == (B, C2)
    assert jnp.allclose(out, ref, atol=1e-5, rtol=1e-5)

    # 2) Odd spatial extent (no fold possible, full-extent block, C1 stays 4).
    x2 = jax.random.normal(kx, (B, C1, 13, 13), dtype=jnp.float32)
    out2 = jax.block_until_ready(classify_forward(x2, weight))
    ref2 = jnp.mean(x2, axis=(2, 3)) @ weight.T
    assert jnp.allclose(out2, ref2, atol=1e-5, rtol=1e-5)

    # 3) Tiled reduction with a masked boundary chunk (HW2=200, chunks of 128).
    x3 = jax.random.normal(kx, (B, C1, 20, 20), dtype=jnp.float32)
    out3 = jax.block_until_ready(classify_forward(x3, weight, hw_chunk=128))
    ref3 = jnp.mean(x3, axis=(2, 3)) @ weight.T
    assert jnp.allclose(out3, ref3, atol=1e-5, rtol=1e-5)

    # 4) Batch tile > 1 (B=4, C1=8 -> TB=2, two parallel row blocks).
    kx4, kw4 = jax.random.split(kw)
    x4 = jax.random.normal(kx4, (4, 8, 16, 16), dtype=jnp.float32)
    w4 = jax.random.uniform(kw4, (C2, 8), dtype=jnp.float32, minval=-0.5, maxval=0.5)
    out4 = jax.block_until_ready(classify_forward(x4, w4))
    ref4 = jnp.mean(x4, axis=(2, 3)) @ w4.T
    assert jnp.allclose(out4, ref4, atol=1e-5, rtol=1e-5)

    print("KERNEL_OK")
</pallas_src>

<mosaic_0001>
module attributes {stable_mosaic.version = 11 : i64} {
  func.func @_classify_kernel(%arg0: i32, %arg1: i32, %arg2: memref<1x8x128xf32, #tpu.memory_space<vmem>>, %arg3: memref<8x128xf32, #tpu.memory_space<vmem>>, %arg4: memref<1x1x128xf32, #tpu.memory_space<vmem>>, %arg5: memref<1x8xf32, #tpu.memory_space<vmem>>) attributes {dimension_semantics = [#tpu.dimension_semantics<parallel>, #tpu.dimension_semantics<arbitrary>], iteration_bounds = array<i64: 2, 1>, scalar_prefetch = 0 : i64, scratch_operands = 1 : i64, tpu.core_type = #tpu.core_type<tc>, window_params = [{transform_indices = @transform_0, window_bounds = array<i64: 1, 8, 128>}, {pipeline_mode = #tpu.pipeline_mode<synchronous>, transform_indices = @transform_1, window_bounds = array<i64: 8, 128>}, {transform_indices = @transform_2, window_bounds = array<i64: 1, 1, 128>}]} {
    %c0_i32 = arith.constant 0 : i32
    %0 = arith.cmpi eq, %arg1, %c0_i32 : i32
    %1 = arith.extui %0 : i1 to i32
    %c0_i32_0 = arith.constant 0 : i32
    %2 = arith.cmpi ne, %1, %c0_i32_0 : i32
    scf.if %2 {
      %cst_9 = arith.constant 0.000000e+00 : f32
      %11 = vector.broadcast %cst_9 : f32 to vector<1x8xf32>
      %c0_10 = arith.constant 0 : index
      %c0_11 = arith.constant 0 : index
      %12 = vector.load %arg5[%c0_10, %c0_11] : memref<1x8xf32, #tpu.memory_space<vmem>>, vector<1x8xf32>
      tpu.vector_store %arg5[%c0_10, %c0_11], %11 {strides = array<i32>} : memref<1x8xf32, #tpu.memory_space<vmem>>, vector<1x8xf32>,
    } else {
    }
    %c0 = arith.constant 0 : index
    %c0_1 = arith.constant 0 : index
    %3 = vector.load %arg5[%c0, %c0_1] : memref<1x8xf32, #tpu.memory_space<vmem>>, vector<1x8xf32>
    %c0_2 = arith.constant 0 : index
    %c0_3 = arith.constant 0 : index
    %c0_4 = arith.constant 0 : index
    %4 = vector.load %arg2[%c0_2, %c0_3, %c0_4] : memref<1x8x128xf32, #tpu.memory_space<vmem>>, vector<1x8x128xf32>
    %cst = arith.constant dense<0.000000e+00> : vector<1x8xf32>
    %5 = vector.multi_reduction <add>, %4, %cst [2] : vector<1x8x128xf32> to vector<1x8xf32>
    %6 = arith.addf %3, %5 : vector<1x8xf32>
    %c0_5 = arith.constant 0 : index
    %c0_6 = arith.constant 0 : index
    %7 = vector.load %arg5[%c0_5, %c0_6] : memref<1x8xf32, #tpu.memory_space<vmem>>, vector<1x8xf32>
    tpu.vector_store %arg5[%c0_5, %c0_6], %6 {strides = array<i32>} : memref<1x8xf32, #tpu.memory_space<vmem>>, vector<1x8xf32>,
    %c0_i32_7 = arith.constant 0 : i32
    %8 = arith.cmpi eq, %arg1, %c0_i32_7 : i32
    %9 = arith.extui %8 : i1 to i32
    %c0_i32_8 = arith.constant 0 : i32
    %10 = arith.cmpi ne, %9, %c0_i32_8 : i32
    scf.if %10 {
      %c0_9 = arith.constant 0 : index
      %c0_10 = arith.constant 0 : index
      %11 = vector.load %arg5[%c0_9, %c0_10] : memref<1x8xf32, #tpu.memory_space<vmem>>, vector<1x8xf32>
      %c0_11 = arith.constant 0 : index
      %c0_12 = arith.constant 0 : index
      %12 = vector.load %arg3[%c0_11, %c0_12] : memref<8x128xf32, #tpu.memory_space<vmem>>, vector<8x128xf32>
      %cst_13 = arith.constant dense<0.000000e+00> : vector<1x128xf32>
      %13 = tpu.matmul %11, %12, %cst_13 {dimension_numbers = #tpu.dot_dimension_numbers<[1], [0], [0], [1], [0, 0, 1, 1], [], []>} : vector<1x8xf32>, vector<8x128xf32>, vector<1x128xf32> -> vector<1x128xf32>
      %c0_14 = arith.constant 0 : index
      %c0_15 = arith.constant 0 : index
      %c0_16 = arith.constant 0 : index
      %14 = vector.load %arg4[%c0_14, %c0_15, %c0_16] : memref<1x1x128xf32, #tpu.memory_space<vmem>>, vector<1x1x128xf32>
      %15 = vector.shape_cast %14 : vector<1x1x128xf32> to vector<1x128xf32>
      %16 = vector.shape_cast %13 : vector<1x128xf32> to vector<1x1x128xf32>
      tpu.vector_store %arg4[%c0_14, %c0_15, %c0_16], %16 {strides = array<i32>} : memref<1x1x128xf32, #tpu.memory_space<vmem>>, vector<1x1x128xf32>,
    } else {
    }
    return
  }
  func.func @transform_0(%arg0: i32, %arg1: i32) -> (i32, i32, i32) {
    %c0_i32 = arith.constant 0 : i32
    %c0_i32_0 = arith.constant 0 : i32
    return %arg0, %c0_i32, %arg1 : i32, i32, i32
  }
  func.func @transform_1(%arg0: i32, %arg1: i32) -> (i32, i32) {
    %c0_i32 = arith.constant 0 : i32
    %c0_i32_0 = arith.constant 0 : i32
    %c0_i32_1 = arith.constant 0 : i32
    return %c0_i32, %c0_i32_0 : i32, i32
  }
  func.func @transform_2(%arg0: i32, %arg1: i32) -> (i32, i32, i32) {
    %c0_i32 = arith.constant 0 : i32
    %c0_i32_0 = arith.constant 0 : i32
    %c0_i32_1 = arith.constant 0 : i32
    return %arg0, %c0_i32, %c0_i32_0 : i32, i32, i32
  }
}

</mosaic_0001>

<llo_original>
// kernel: tpu_custom_call.1
$region0: #{tpu_custom_call.1}
  #allocation0 [shape = 'u32[]', space=smem, size = 0x4, offset = 0x4, fixed_abs, tag = 'smem constant byte address 0x4 - core index']
  #allocation1 [shape = 'u32[144,128]{1,0:T(1,128)}', space=vmem, size = 0x12000, scoped, tag = 'internal scratch']
  #allocation2 [shape = 'f32[1,8]{1,0:T(1,128)}', space=vmem, size = 0x200, scoped, tag = 'scratch operand']
  %s0 = inlined_call_operand.hbm [shape: f32[2,8,128], index: 0, kind: input, shape index: {}]
  %s1 = inlined_call_operand.hbm [shape: f32[8,128], index: 1, kind: input, shape index: {}]
  %s2 = inlined_call_operand.hbm [shape: f32[2,1,128], index: 2, kind: output, shape index: {}]
  %s3 = sld [smem:[#allocation0]]
  $region57: #{tpu_custom_call.1} parent=0
    _
  %s5 = ssub.s32 1, %s3
  %s6 = scalar_select 0, %s5, %s3
  $region1: #{tpu_custom_call.1} parent=0
    #allocation3 [shape = 'u8[8192]{0}', space=vmem, size = 0x2000, scoped, tag = 'input window, operand 0']
    #allocation4 [shape = 's32[2]{0}', space=sflag, size = 0x8, scoped, tag = 'scoped memory for tpu_custom_call.1']
    #allocation5 [shape = 's32[2]{0}', space=sflag, size = 0x8, scoped, tag = 'scoped memory for tpu_custom_call.1']
    #allocation6 [shape = 'u8[4096]{0}', space=vmem, size = 0x1000, scoped, tag = 'input window, operand 1, single buffered']
    #allocation7 [shape = 's32[1]{0}', space=sflag, size = 0x4, scoped, tag = 'scoped memory for tpu_custom_call.1']
    #allocation8 [shape = 'u8[1024]{0}', space=vmem, size = 0x400, scoped, tag = 'output window, operand 0']
    %7 = vsyncpa [#allocation4], 0
    %s8 = scalar_lea.sflag [#allocation4], 1
    %9 = vsyncpa %s8, 0
    %10 = vsyncpa [#allocation7], 0
    %11 = vsyncpa [#allocation5], 0
    %s12 = scalar_lea.sflag [#allocation5], 1
    %13 = vsyncpa %s12, 0
    loop: start=0, step=1, limit=4
    $region2: #{tpu_custom_call.1} parent=1 // loop_pre_header
      _
    $region3: #{tpu_custom_call.1} parent=1 // loop_header
      %s15 = sphi 0, %s19
      %p16 = scmp.ge.s32.totalorder %s15, 4
      %s22 = sphi 0, %s34
      %s23 = sphi 0, %s30
      %s24 = sphi 0, %s22
      %s25 = sphi 0, %s23
      %s26 = sphi 0, %s24
      %s27 = sphi 0, %s25
      %s39 = sphi 0, %s41
      %s42 = sphi 0, %s39
      %s43 = sphi 0, %s42
      %s59 = sphi 0, %s43
      %s63 = sphi 0, %s63
      %s65 = sphi 0, %s63
      %s66 = sphi 0, %s65
      %s80 = sphi 0, %s66
      %s86 = sphi 0, %s88
      %s89 = sphi 0, %s86
      %s90 = sphi 0, %s89
      %s106 = sphi 0, %s90
    $region4: #{tpu_custom_call.1} parent=1 // loop_header_branch
      %18 = sbr.rel (%p16) target = $region8
    $region5: #{tpu_custom_call.1} parent=1 // loop_body
      %s20 = ssub.s32 %s15, 1
      %s21 = ssub.s32 %s15, 2
      %s28 = sadd.s32 1, %s23
      %p29 = scmp.ge.s32.totalorder %s28, 1
      %s30 = scalar_select %p29, 0, %s28
      %s31 = sadd.s32 1, %s22
      %s32 = scalar_select %p29, %s31, %s22
      %p33 = scmp.ge.s32.totalorder %s32, 2
      %s34 = scalar_select %p33, 0, %s32
      %s35 = ssub.s32 %s22, %s34
      %s36 = ssub.s32 %s23, %s30
      %s37 = sor.u32 %s35, %s36
      %p38 = scmp.eq.s32.totalorder %s37, 0
      %s40 = sadd.s32 %s39, 1
      %s41 = scalar_select %p38, %s39, %s40
      %p44 = pneg %p38
      %p45 = scmp.eq.s32.totalorder %s15, 1
      %p46 = por %p44, %p45
      %p47 = scmp.ne.s32.totalorder %s39, %s42
      %p48 = scmp.eq.s32.totalorder %s15, 0
      %p49 = por %p47, %p48
      %p50 = scmp.ne.s32.totalorder %s39, %s42
      %p51 = scmp.eq.s32.totalorder %s20, 1
      %p52 = por %p50, %p51
      %p53 = scmp.ne.s32.totalorder %s42, %s43
      %p54 = scmp.eq.s32.totalorder %s20, 0
      %p55 = por %p53, %p54
      %p56 = scmp.ne.s32.totalorder %s42, %s43
      %p57 = scmp.eq.s32.totalorder %s21, 1
      %p58 = por %p56, %p57
      %p60 = scmp.ne.s32.totalorder %s43, %s59
      %p61 = scmp.eq.s32.totalorder %s21, 0
      %p62 = por %p60, %p61
      %s64 = sadd.s32 %s63, 1
      %p67 = scmp.eq.s32.totalorder %s15, 1
      %p68 = scmp.ne.s32.totalorder %s63, %s65
      %p69 = scmp.eq.s32.totalorder %s15, 0
      %p70 = por %p68, %p69
      %p71 = scmp.ne.s32.totalorder %s63, %s65
      %p72 = scmp.eq.s32.totalorder %s20, 1
      %p73 = por %p71, %p72
      %p74 = scmp.ne.s32.totalorder %s65, %s66
      %p75 = scmp.eq.s32.totalorder %s20, 0
      %p76 = por %p74, %p75
      %p77 = scmp.ne.s32.totalorder %s65, %s66
      %p78 = scmp.eq.s32.totalorder %s21, 1
      %p79 = por %p77, %p78
      %p81 = scmp.ne.s32.totalorder %s66, %s80
      %p82 = scmp.eq.s32.totalorder %s21, 0
      %p83 = por %p81, %p82
      %s84 = ssub.s32 %s22, %s34
      %p85 = scmp.eq.s32.totalorder %s84, 0
      %s87 = sadd.s32 %s86, 1
      %s88 = scalar_select %p85, %s86, %s87
      %p91 = pneg %p85
      %p92 = scmp.eq.s32.totalorder %s15, 1
      %p93 = por %p91, %p92
      %p94 = scmp.ne.s32.totalorder %s86, %s89
      %p95 = scmp.eq.s32.totalorder %s15, 0
      %p96 = por %p94, %p95
      %p97 = scmp.ne.s32.totalorder %s86, %s89
      %p98 = scmp.eq.s32.totalorder %s20, 1
      %p99 = por %p97, %p98
      %p100 = scmp.ne.s32.totalorder %s89, %s90
      %p101 = scmp.eq.s32.totalorder %s20, 0
      %p102 = por %p100, %p101
      %p103 = scmp.ne.s32.totalorder %s89, %s90
      %p104 = scmp.eq.s32.totalorder %s21, 1
      %p105 = por %p103, %p104
      %p107 = scmp.ne.s32.totalorder %s90, %s106
      %p108 = scmp.eq.s32.totalorder %s21, 0
      %p109 = por %p107, %p108
      %p110 = scmp.le.s32.totalorder 1, %s15
      %p111 = scmp.lt.s32.totalorder %s15, 3
      %p112 = pnand %p110, %p111
      %p113 = pneg %p112
      // Predicated region
      $region9: #{tpu_custom_call.1} parent=5 // pred_check
        _
      $region10: #{tpu_custom_call.1} parent=5 // pred_check_branch
        %115 = sbr.rel (%p112) target = $region12
      $region11: #{tpu_custom_call.1} parent=5 // pred_region
        %s116 = ssub.s32 %s15, 1
        // Predicated region
        $region13: #{tpu_custom_call.1} parent=11 // pred_check
          %p117 = pneg %p76
        $region14: #{tpu_custom_call.1} parent=11 // pred_check_branch
          %119 = sbr.rel (%p117) target = $region16
        $region15: #{tpu_custom_call.1} parent=11 // pred_region
          %s121 = ssub.s32 128, 128
          %122 = vsyncadd [#allocation7], %s121
          %s124 = sshll.u32 [#allocation6], 4
          %s125 = int_to_ptr.vmem [resolvable:$true] %s124
          %127 = dma.hbm_to_vmem [thread:$0]  %s1, 128, %s125, [#allocation7]
        $region16: #{tpu_custom_call.1} parent=11 // pred_fallthru
          _
      $region12: #{tpu_custom_call.1} parent=5 // pred_fallthru
        _
      %p128 = scmp.lt.s32.totalorder %s15, 2
      // Predicated region
      $region17: #{tpu_custom_call.1} parent=5 // pred_check
        %p129 = pneg %p128
      $region18: #{tpu_custom_call.1} parent=5 // pred_check_branch
        %131 = sbr.rel (%p129) target = $region20
      $region19: #{tpu_custom_call.1} parent=5 // pred_region
        // Predicated region
        $region21: #{tpu_custom_call.1} parent=19 // pred_check
          %p132 = pneg %p49
        $region22: #{tpu_custom_call.1} parent=19 // pred_check_branch
          %134 = sbr.rel (%p132) target = $region24
        $region23: #{tpu_custom_call.1} parent=19 // pred_region
          %s135 = sand.u32 %s39, 1
          %s136 = scalar_lea.sflag [#allocation4], %s135
          %s137 = sand.u32 %s39, 1
          %s138 = smul.addr %s137, 8
          %s139 = scalar_lea.vmem [#allocation3], %s138
          %s141 = ssub.s32 128, 128
          %142 = vsyncadd %s136, %s141
          %s143 = sadd.s32 %s23, %s22
          %s144 = smul.addr %s143, 128
          %s145 = scalar_lea.hbm %s0, %s144
          %s147 = sshll.u32 %s139, 4
          %s148 = int_to_ptr.vmem [resolvable:$true] %s147
          %150 = dma.hbm_to_vmem [thread:$0]  %s145, 128, %s148, %s136
        $region24: #{tpu_custom_call.1} parent=19 // pred_fallthru
          _
      $region20: #{tpu_custom_call.1} parent=5 // pred_fallthru
        _
      %p151 = scmp.le.s32.totalorder 1, %s15
      %p152 = scmp.lt.s32.totalorder %s15, 3
      %p153 = pnand %p151, %p152
      %p154 = pneg %p153
      // Predicated region
      $region25: #{tpu_custom_call.1} parent=5 // pred_check
        _
      $region26: #{tpu_custom_call.1} parent=5 // pred_check_branch
        %156 = sbr.rel (%p153) target = $region28
      $region27: #{tpu_custom_call.1} parent=5 // pred_region
        %s157 = ssub.s32 %s15, 1
        %s158 = sand.u32 %s42, 1
        %s159 = scalar_lea.sflag [#allocation4], %s158
        %s160 = sand.u32 %s42, 1
        %s161 = smul.addr %s160, 8
        %s162 = scalar_lea.vmem [#allocation3], %s161
        // Predicated region
        $region29: #{tpu_custom_call.1} parent=27 // pred_check
          %p163 = pneg %p55
        $region30: #{tpu_custom_call.1} parent=27 // pred_check_branch
          %165 = sbr.rel (%p163) target = $region32
        $region31: #{tpu_custom_call.1} parent=27 // pred_region
          %166 = dma.done %s159, 128
        $region32: #{tpu_custom_call.1} parent=27 // pred_fallthru
          _
        // Predicated region
        $region33: #{tpu_custom_call.1} parent=27 // pred_check
          %p167 = pneg %p76
        $region34: #{tpu_custom_call.1} parent=27 // pred_check_branch
          %169 = sbr.rel (%p167) target = $region36
        $region35: #{tpu_custom_call.1} parent=27 // pred_region
          %170 = dma.done [#allocation7], 128
        $region36: #{tpu_custom_call.1} parent=27 // pred_fallthru
          _
        %s171 = sand.u32 %s42, 1
        %s172 = scalar_lea.sflag [#allocation4], %s171
        %s173 = sand.u32 %s42, 1
        %s174 = smul.addr %s173, 8
        %s175 = scalar_lea.vmem [#allocation3], %s174
        %p176 = pneg %p55
        %p177 = pneg %p52
        %p178 = pneg %p76
        %p179 = pneg %p73
        %p180 = pneg %p102
        %p181 = pneg %p99
        %s182 = sand.u32 %s89, 1
        %s183 = scalar_lea.sflag [#allocation5], %s182
        %s184 = sand.u32 %s89, 1
        %s185 = scalar_lea.vmem [#allocation8], %s184
        %p186 = scmp.eq.s32.totalorder %s25, 0
        // Predicated region
        $region37: #{tpu_custom_call.1} parent=27 // pred_check
          %p187 = pneg %p186
        $region38: #{tpu_custom_call.1} parent=27 // pred_check_branch
          %189 = sbr.rel (%p187) target = $region40
        $region39: #{tpu_custom_call.1} parent=27 // pred_region
          %vm190 = vcmask 57344
          %191 = vst.msk [vmem:[#allocation2] sm:$0x1] %vm190, 0.0
        $region40: #{tpu_custom_call.1} parent=27 // pred_fallthru
          _
        %v192 = vld [vmem:[#allocation2] sm:$0x1]
        %v193 = vld [vmem:[%s162] sm:$0xff]
        %194 = vadd.xlane.f32.xlu0 %v193
        %v195 = vpop.xlane.xlu0 %194
        %v197 = vlaneseq
        %v198 = vshrl.u32 %v197, 7
        %v199 = vsub.s32 0, %v198
        %v200 = vrot.slane %v195, %v199
        %v201 = vlaneseq
        %v202 = vshrl.u32 %v201, 7
        %v203 = vsub.s32 1, %v202
        %v204 = vrot.slane %v195, %v203
        %v205 = vlaneseq
        %v206 = vshrl.u32 %v205, 7
        %v207 = vsub.s32 2, %v206
        %v208 = vrot.slane %v195, %v207
        %v209 = vlaneseq
        %v210 = vshrl.u32 %v209, 7
        %v211 = vsub.s32 3, %v210
        %v212 = vrot.slane %v195, %v211
        %v213 = vlaneseq
        %v214 = vshrl.u32 %v213, 7
        %v215 = vsub.s32 4, %v214
        %v216 = vrot.slane %v195, %v215
        %v217 = vlaneseq
        %v218 = vshrl.u32 %v217, 7
        %v219 = vsub.s32 5, %v218
        %v220 = vrot.slane %v195, %v219
        %v221 = vlaneseq
        %v222 = vshrl.u32 %v221, 7
        %v223 = vsub.s32 6, %v222
        %v224 = vrot.slane %v195, %v223
        %v225 = vlaneseq
        %v226 = vshrl.u32 %v225, 7
        %v227 = vsub.s32 7, %v226
        %v228 = vrot.slane %v195, %v227
        %v229 = vcombine.low %v200, %v204
        %v230 = vcombine.low %v208, %v212
        %v231 = vcombine.low %v216, %v220
        %v232 = vcombine.low %v224, %v228
        %v234 = vunpack.c.l.s4 1966171168
        %v235 = vunpack.c.0.s8 %v234
        %v236 = vlaneseq
        %v237 = vshrl.u32 %v236, 7
        %v238 = vsub.s32 %v235, %v237
        %v239 = vrot.slane %v229, %v238
        %v241 = vunpack.c.l.s4 1966171168
        %v242 = vunpack.c.0.s8 %v241
        %v243 = vlaneseq
        %v244 = vshrl.u32 %v243, 7
        %v245 = vsub.s32 %v242, %v244
        %v246 = vrot.slane %v230, %v245
        %v248 = vunpack.c.l.s4 1966171168
        %v249 = vunpack.c.0.s8 %v248
        %v250 = vlaneseq
        %v251 = vshrl.u32 %v250, 7
        %v252 = vsub.s32 %v249, %v251
        %v253 = vrot.slane %v231, %v252
        %v255 = vunpack.c.l.s4 1966171168
        %v256 = vunpack.c.0.s8 %v255
        %v257 = vlaneseq
        %v258 = vshrl.u32 %v257, 7
        %v259 = vsub.s32 %v256, %v258
        %v260 = vrot.slane %v232, %v259
        %v261 = vcombine.low %v239, %v246
        %v262 = vcombine.low %v253, %v260
        %v264 = vunpack.c.l.s4 1966171168
        %v265 = vunpack.c.0.s8 %v264
        %v266 = vlaneseq
        %v267 = vshrl.u32 %v266, 7
        %v268 = vsub.s32 %v265, %v267
        %v269 = vrot.slane %v261, %v268
        %v271 = vunpack.c.l.s4 1966171168
        %v272 = vunpack.c.0.s8 %v271
        %v273 = vlaneseq
        %v274 = vshrl.u32 %v273, 7
        %v275 = vsub.s32 %v272, %v274
        %v276 = vrot.slane %v262, %v275
        %v277 = vcombine.low %v269, %v276
        %278 = vset.pattern.permute.xlu0 0
        %279 = vperm.xlu0 %278, %v277
        %v280 = vpop.permute.xlu0 %279
        %v281 = vlaneseq
        %v282 = vand.u32 %v281, 127
        %v283 = vlaneseq
        %v284 = vshrl.u32 %v283, 7
        %v285 = vsub.s32 %v282, %v284
        %v286 = vrot.slane %v280, %v285
        %v288 = vunpack.c.l.s4 1966171168
        %v289 = vunpack.c.0.s8 %v288
        %v290 = vlaneseq
        %v291 = vshrl.u32 %v290, 7
        %v292 = vsub.s32 %v289, %v291
        %v293 = vrot.slane %v286, %v292
        %v295 = vunpack.c.l.s4 1966171168
        %v296 = vunpack.c.0.s8 %v295
        %v297 = vlaneseq
        %v298 = vshrl.u32 %v297, 7
        %v299 = vsub.s32 %v296, %v298
        %v300 = vrot.slane %v293, %v299
        %v302 = vadd.f32 %v192, %v300
        %vm303 = vcmask 57344
        %304 = vst.msk [vmem:[#allocation2] sm:$0x1] %vm303, %v302
        // Predicated region
        $region41: #{tpu_custom_call.1} parent=27 // pred_check
          %p305 = pneg %p186
        $region42: #{tpu_custom_call.1} parent=27 // pred_check_branch
          %307 = sbr.rel (%p305) target = $region44
        $region43: #{tpu_custom_call.1} parent=27 // pred_region
          %v308 = vld [vmem:[#allocation2] sm:$0x1]
          %v309 = vld [vmem:[#allocation6] sm:$0xff]
          %vm310 = vcmask 64512
          %v312 = vsel %vm310, %v308, 0
          %314 = vmatprep.subr.mxu0 0.0
          %315 = vmatpush1.msra.mxu0 %v309
          %316 = vmatprep.subr.mxu0 0.0
          %317 = vmatpush1.msra.mxu0 0.0
          %318 = vmatprep.subr.mxu0 0.0
          %319 = vmatpush1.msra.mxu0 0.0
          %320 = vmatprep.subr.mxu0 0.0
          %321 = vmatpush1.msra.mxu0 0.0
          %322 = vmatprep.subr.mxu0 0.0
          %323 = vmatpush1.msra.mxu0 0.0
          %324 = vmatprep.subr.mxu0 0.0
          %325 = vmatpush1.msra.mxu0 0.0
          %326 = vmatprep.subr.mxu0 0.0
          %327 = vmatpush1.msra.mxu0 0.0
          %328 = vmatprep.subr.mxu0 0.0
          %329 = vmatpush1.msra.mxu0 0.0
          %330 = vmatprep.subr.mxu0 0.0
          %331 = vmatpush1.msra.mxu0 0.0
          %332 = vmatprep.subr.mxu0 0.0
          %333 = vmatpush1.msra.mxu0 0.0
          %334 = vmatprep.subr.mxu0 0.0
          %335 = vmatpush1.msra.mxu0 0.0
          %336 = vmatprep.subr.mxu0 0.0
          %337 = vmatpush1.msra.mxu0 0.0
          %338 = vmatprep.subr.mxu0 0.0
          %339 = vmatpush1.msra.mxu0 0.0
          %340 = vmatprep.subr.mxu0 0.0
          %341 = vmatpush1.msra.mxu0 0.0
          %342 = vmatprep.subr.mxu0 0.0
          %343 = vmatpush1.msra.mxu0 0.0
          %344 = vmatprep.subr.mxu0 0.0
          %345 = vmatpush1.msra.mxu0 0.0
          %346 = vmatprep.subr.mxu0 0.0
          %347 = vmatpush1.msra.mxu0 0.0
          %348 = vmatprep.subr.mxu0 0.0
          %349 = vmatpush1.msra.mxu0 0.0
          %350 = vmatprep.subr.mxu0 0.0
          %351 = vmatpush1.msra.mxu0 0.0
          %352 = vmatprep.subr.mxu0 0.0
          %353 = vmatpush1.msra.mxu0 0.0
          %354 = vmatprep.subr.mxu0 0.0
          %355 = vmatpush1.msra.mxu0 0.0
          %356 = vmatprep.subr.mxu0 0.0
          %357 = vmatpush1.msra.mxu0 0.0
          %358 = vmatprep.subr.mxu0 0.0
          %359 = vmatpush1.msra.mxu0 0.0
          %360 = vmatprep.subr.mxu0 0.0
          %361 = vmatpush1.msra.mxu0 0.0
          %362 = vmatprep.subr.mxu0 0.0
          %363 = vmatpush1.msra.mxu0 0.0
          %364 = vmatprep.subr.mxu0 0.0
          %365 = vmatpush1.msra.mxu0 0.0
          %366 = vmatprep.subr.mxu0 0.0
          %367 = vmatpush1.msra.mxu0 0.0
          %368 = vmatprep.subr.mxu0 0.0
          %369 = vmatpush1.msra.mxu0 0.0
          %370 = vmatprep.subr.mxu0 0.0
          %371 = vmatpush1.msra.mxu0 0.0
          %372 = vmatprep.subr.mxu0 0.0
          %373 = vmatpush1.msra.mxu0 0.0
          %374 = vmatprep.subr.mxu0 0.0
          %375 = vmatpush1.msra.mxu0 0.0
          %376 = vmatprep.subr.mxu0 0.0
          %377 = vmatpush1.msra.mxu0 0.0
          %378 = vmatprep.mubr.f32.mxu0 0.0
          %379 = vmatmul.mubr.f32.gmra.mrb[0].mxu0 %v312
          %v380 = vpop.f32.mrb[0].mxu0
          %v381 = vadd.f32 0.0, %v380
          %v382 = vpop.f32.mrb[0].mxu0
          %383 = vdwg.mxu0
          %384 = vst [vmem:[%s185] sm:$0x1] %v381
        $region44: #{tpu_custom_call.1} parent=27 // pred_fallthru
          _
        %s385 = sand.u32 %s89, 1
        %s386 = scalar_lea.sflag [#allocation5], %s385
        %s387 = sand.u32 %s89, 1
        %s388 = scalar_lea.vmem [#allocation8], %s387
        // Predicated region
        $region45: #{tpu_custom_call.1} parent=27 // pred_check
          %p389 = pneg %p99
        $region46: #{tpu_custom_call.1} parent=27 // pred_check_branch
          %391 = sbr.rel (%p389) target = $region48
        $region47: #{tpu_custom_call.1} parent=27 // pred_region
          %s393 = ssub.s32 16, 16
          %394 = vsyncadd %s386, %s393
          %s395 = smul.addr %s24, 16
          %s396 = scalar_lea.hbm %s2, %s395
          %s398 = sshll.u32 %s388, 4
          %s399 = int_to_ptr.vmem [resolvable:$true] %s398
          %401 = dma.vmem_to_hbm [thread:$0]  %s399, 16, %s396, %s386
        $region48: #{tpu_custom_call.1} parent=27 // pred_fallthru
          _
      $region28: #{tpu_custom_call.1} parent=5 // pred_fallthru
        _
      %p402 = scmp.le.s32.totalorder 2, %s15
      // Predicated region
      $region49: #{tpu_custom_call.1} parent=5 // pred_check
        %p403 = pneg %p402
      $region50: #{tpu_custom_call.1} parent=5 // pred_check_branch
        %405 = sbr.rel (%p403) target = $region52
      $region51: #{tpu_custom_call.1} parent=5 // pred_region
        %s406 = ssub.s32 %s15, 2
        // Predicated region
        $region53: #{tpu_custom_call.1} parent=51 // pred_check
          %p407 = pneg %p105
        $region54: #{tpu_custom_call.1} parent=51 // pred_check_branch
          %409 = sbr.rel (%p407) target = $region56
        $region55: #{tpu_custom_call.1} parent=51 // pred_region
          %s410 = sand.u32 %s90, 1
          %s411 = scalar_lea.sflag [#allocation5], %s410
          %s412 = sand.u32 %s90, 1
          %s413 = scalar_lea.vmem [#allocation8], %s412
          %414 = dma.done %s411, 16
        $region56: #{tpu_custom_call.1} parent=51 // pred_fallthru
          _
      $region52: #{tpu_custom_call.1} parent=5 // pred_fallthru
        _
    $region6: #{tpu_custom_call.1} parent=1 // loop_footer
      %s19 = sadd.s32 1, %s15
    $region7: #{tpu_custom_call.1} parent=1 // loop_footer_branch
      %14 = sbr.rel target = $region3
    $region8: #{tpu_custom_call.1} parent=1 // loop_exit
      _
    %415 = vsyncpa [#allocation4], 1
    %s416 = scalar_lea.sflag [#allocation4], 1
    %417 = vsyncpa %s416, 1
    %418 = vsyncpa [#allocation7], 1
    %419 = vsyncpa [#allocation5], 1
    %s420 = scalar_lea.sflag [#allocation5], 1
    %421 = vsyncpa %s420, 1

</llo_original>
